<compile_context>
chip_gen: v7x
topology: tpu7x:2x2x1
jax: 0.10.0
libtpu: 0.0.40
codegen_flags: <defaults>
</compile_context>

<pallas_src>
import functools

import jax
import jax.numpy as jnp
import numpy as np
from jax import lax
from jax.experimental import pallas as pl
from jax.experimental.pallas import tpu as pltpu


def _round_up(x, m):
    return ((x + m - 1) // m) * m


def _cnn_kernel(x_ref, wc_ref, bc_ref, w1_ref, b1_ref, w2_ref, b2_ref, o_ref,
                *, sb, n_sub):
    # Weights / biases are tiny and VMEM-resident; load once per grid step.
    w_eff = wc_ref[...]          # (K, F0)   f32, conv-as-dense weight
    bc = bc_ref[...]             # (1, F0)   f32
    w1 = w1_ref[...]             # (F0, F1p) bf16 (production) or f32
    b1 = b1_ref[...]             # (1, F1p)  f32
    w2 = w2_ref[...]             # (1, F1p)  f32 (padded lanes are exactly zero)
    b2 = b2_ref[0]               # scalar    f32 (SMEM)
    K = w_eff.shape[0]

    def sub_tile(x):             # x: (sb, K) f32  ->  y: (sb,) f32
        # Layer 0 (conv collapses to a dense layer): K static rank-1 FMAs on the VPU.
        h0 = bc
        for k in range(K):       # K = seq*n_ft (tiny, static) -> fully unrolled
            h0 = h0 + x[:, k:k + 1] * w_eff[k:k + 1, :]
        h0 = jnp.maximum(h0, 0.0)
        # Layer 1 (64 -> 50, padded to 128 lanes) on the MXU; f32 accumulate.
        h1 = jnp.dot(h0.astype(w1.dtype), w1,
                     preferred_element_type=jnp.float32) + b1
        h1 = jnp.maximum(h1, 0.0)
        # Layer 2 (50 -> 1): VPU multiply + XLU lane reduction (padded lanes are zero).
        return jnp.sum(h1 * w2, axis=-1) + b2

    if n_sub == 1:
        # Small tile: single pass, one lane-dense store of the whole tile.
        o_ref[...] = sub_tile(x_ref[...])[None, :]
    else:
        # Large tile: iterate 128-row sub-tiles; bounds the vreg live set while the
        # grid-step count (and its fixed overhead) shrinks.
        def body(s, carry):
            off = pl.multiple_of(s * sb, sb)
            y = sub_tile(x_ref[pl.ds(off, sb), :])
            o_ref[pl.ds(s, 1), :] = y[None, :]        # full-lane (1, sb) store
            return carry

        lax.fori_loop(0, n_sub, body, 0, unroll=True)


@functools.partial(jax.jit, static_argnames=("tb", "sb"))
def _forward_padded(xp, w_eff, b_eff, w1p, b1p, w2row, b2s, *, tb, sb):
    Bp, K = xp.shape
    F0 = w_eff.shape[1]
    F1p = w1p.shape[1]
    n_tiles = Bp // tb
    n_sub = tb // sb

    flops = 2 * Bp * (K * F0 + F0 * F1p + F1p)
    bytes_accessed = (Bp * (K + 1) * 4
                      + (K * F0 + F0 + F0 * F1p + 2 * F1p + 1) * 4)

    kernel = functools.partial(_cnn_kernel, sb=sb, n_sub=n_sub)
    out = pl.pallas_call(
        kernel,
        out_shape=jax.ShapeDtypeStruct((n_tiles, n_sub, sb), jnp.float32),
        grid_spec=pltpu.PrefetchScalarGridSpec(
            num_scalar_prefetch=0,
            grid=(n_tiles,),
            in_specs=[
                pl.BlockSpec((tb, K), lambda i: (i, 0)),      # x tile (full K, no pad)
                pl.BlockSpec((K, F0), lambda i: (0, 0)),      # conv-as-dense weight
                pl.BlockSpec((1, F0), lambda i: (0, 0)),      # conv bias
                pl.BlockSpec((F0, F1p), lambda i: (0, 0)),    # Linear1 weight (bf16/f32)
                pl.BlockSpec((1, F1p), lambda i: (0, 0)),     # Linear1 bias
                pl.BlockSpec((1, F1p), lambda i: (0, 0)),     # Linear2 weight row
                pl.BlockSpec(memory_space=pltpu.MemorySpace.SMEM),  # Linear2 bias scalar
            ],
            out_specs=pl.BlockSpec((None, n_sub, sb), lambda i: (i, 0, 0)),
        ),
        compiler_params=pltpu.CompilerParams(
            dimension_semantics=("parallel",)),
        cost_estimate=pl.CostEstimate(flops=flops, transcendentals=0,
                                      bytes_accessed=bytes_accessed),
    )(xp, w_eff, b_eff, w1p, b1p, w2row, b2s)
    return out.reshape(Bp)


def _choose_tiling(B, max_tile=1024, sub_tile=128):
    """Pick (n_tiles, TB, SB) minimizing padding while keeping >=2 (even) grid steps
    for v7x megacore once B is large enough, and sub-tiling large DMA tiles in-kernel."""
    n_tiles = -(-B // max_tile)
    if B >= 16:
        n_tiles = max(2, 2 * ((n_tiles + 1) // 2))   # at least 2, and even
    tb0 = -(-B // n_tiles)
    if tb0 > 256:
        sb = sub_tile                 # inner fori_loop over tb//sb sub-tiles
        tb = _round_up(tb0, sb)
    else:
        sb = _round_up(tb0, 8)        # single in-kernel pass, minimal batch padding
        tb = sb
    return n_tiles, tb, sb


def prepare_params(params, sequence=3, n_ft=1, use_bf16=True):
    """One-time weight preparation (conv->dense, transposes, padding, dtype cast).

    use_bf16=True is the production path (MXU-native operands on v5e/v6e/v7x, f32
    accumulate in-kernel); it intentionally rounds h0/w1 to bf16 before the matmul.
    """
    wc, bc, w1, b1, w2, b2 = (params[k] for k in ("wc", "bc", "w1", "b1", "w2", "b2"))
    C = 64
    K = sequence * n_ft
    F0 = C * n_ft
    F1 = 50
    F1p = _round_up(F1, 128)

    # Dense-equivalent conv weight, matching PyTorch's channel-major flatten(1) order:
    #   h0[b, c*n_ft + w] = sum_kh wc[c,0,kh,0] * x[b, kh, w] + bc[c]
    wc2 = wc[:, 0, :, 0].astype(jnp.float32)                        # (C, seq)
    eye = jnp.eye(n_ft, dtype=jnp.float32)
    w_eff = jnp.einsum("ck,wv->kwcv", wc2, eye).reshape(K, F0)      # (K, F0)
    b_eff = jnp.repeat(bc.astype(jnp.float32), n_ft)[None, :]       # (1, F0)

    w1p = jnp.pad(w1.T.astype(jnp.float32), ((0, 0), (0, F1p - F1)))    # (F0, F1p)
    b1p = jnp.pad(b1.astype(jnp.float32)[None, :], ((0, 0), (0, F1p - F1)))
    w2row = jnp.pad(w2.astype(jnp.float32), ((0, 0), (0, F1p - F1)))    # (1, F1p)
    b2s = b2.astype(jnp.float32).reshape(-1)                            # (1,) -> SMEM

    if use_bf16:  # MXU-native operands (accumulation stays f32 in-kernel)
        w1p = w1p.astype(jnp.bfloat16)

    return dict(K=K, F0=F0, F1p=F1p,
                w_eff=w_eff, b_eff=b_eff, w1p=w1p, b1p=b1p, w2row=w2row, b2s=b2s)


def cnn_network_forward(x, prep, max_tile=1024):
    """x: (B, sequence, n_ft) float32 — the PyTorch input before unsqueeze(1)."""
    K = prep["K"]
    B = x.shape[0]
    x_flat = x.reshape(B, K).astype(jnp.float32)

    n_tiles, tb, sb = _choose_tiling(B, max_tile)
    Bp = n_tiles * tb
    xp = jnp.pad(x_flat, ((0, Bp - B), (0, 0)))

    out = _forward_padded(xp, prep["w_eff"], prep["b_eff"], prep["w1p"],
                          prep["b1p"], prep["w2row"], prep["b2s"], tb=tb, sb=sb)
    return out[:B][:, None]


def init_params(key, sequence=3, n_ft=1):
    """Deterministic PyTorch-style (uniform +/- 1/sqrt(fan_in)) init."""
    ks = jax.random.split(key, 6)
    C = 64
    lim_c = 1.0 / np.sqrt(1 * sequence * 1)
    wc = jax.random.uniform(ks[0], (C, 1, sequence, 1), jnp.float32, -lim_c, lim_c)
    bc = jax.random.uniform(ks[1], (C,), jnp.float32, -lim_c, lim_c)
    lim1 = 1.0 / np.sqrt(C * n_ft)
    w1 = jax.random.uniform(ks[2], (50, C * n_ft), jnp.float32, -lim1, lim1)
    b1 = jax.random.uniform(ks[3], (50,), jnp.float32, -lim1, lim1)
    lim2 = 1.0 / np.sqrt(50)
    w2 = jax.random.uniform(ks[4], (1, 50), jnp.float32, -lim2, lim2)
    b2 = jax.random.uniform(ks[5], (1,), jnp.float32, -lim2, lim2)
    return dict(wc=wc, bc=bc, w1=w1, b1=b1, w2=w2, b2=b2)


def reference_forward(x, params):
    """Pure-JAX reference mirroring the PyTorch forward (NCHW conv), all f32."""
    xi = x[:, None, :, :]  # (B, 1, seq, n_ft) == NCHW
    out = jax.lax.conv_general_dilated(
        xi, params["wc"], window_strides=(1, 1), padding="VALID",
        dimension_numbers=("NCHW", "OIHW", "NCHW"))
    out = out + params["bc"][None, :, None, None]
    out = jnp.maximum(out, 0.0)
    out = out.reshape(out.shape[0], -1)
    h1 = jnp.maximum(out @ params["w1"].T + params["b1"], 0.0)
    return h1 @ params["w2"].T + params["b2"]


if __name__ == "__main__":
    sequence, n_ft = 3, 1

    key = jax.random.PRNGKey(0)
    kx, kp = jax.random.split(key)
    params = init_params(kp, sequence=sequence, n_ft=n_ft)

    prep_f32 = prepare_params(params, sequence, n_ft, use_bf16=False)   # numerics check
    prep_bf16 = prepare_params(params, sequence, n_ft, use_bf16=True)   # production path

    # B=8: single small tile.  B=300: 2 tiles of 152 (minimal padding, megacore split).
    # B=1000: 2 tiles of 512 with 4x128-row in-kernel sub-tiling (fori_loop path).
    for B in (8, 300, 1000):
        xb = jax.random.normal(jax.random.fold_in(kx, B), (B, sequence, n_ft),
                               dtype=jnp.float32)
        y_ref = np.asarray(reference_forward(xb, params))

        y32 = jax.block_until_ready(cnn_network_forward(xb, prep_f32))
        np.testing.assert_allclose(np.asarray(y32), y_ref, rtol=1e-5, atol=1e-5)

        y16 = jax.block_until_ready(cnn_network_forward(xb, prep_bf16))
        np.testing.assert_allclose(np.asarray(y16), y_ref, rtol=5e-2, atol=2e-2)

    print("KERNEL_OK")
</pallas_src>

<mosaic_0001>
module attributes {stable_mosaic.version = 11 : i64} {
  func.func @_cnn_kernel(%arg0: i32, %arg1: memref<8x3xf32, #tpu.memory_space<vmem>>, %arg2: memref<3x64xf32, #tpu.memory_space<vmem>>, %arg3: memref<1x64xf32, #tpu.memory_space<vmem>>, %arg4: memref<64x128xf32, #tpu.memory_space<vmem>>, %arg5: memref<1x128xf32, #tpu.memory_space<vmem>>, %arg6: memref<1x128xf32, #tpu.memory_space<vmem>>, %arg7: memref<1xf32, #tpu.memory_space<smem>>, %arg8: memref<1x1x8xf32, #tpu.memory_space<vmem>>) attributes {dimension_semantics = [#tpu.dimension_semantics<parallel>], iteration_bounds = array<i64: 1>, scalar_prefetch = 0 : i64, scratch_operands = 0 : i64, tpu.core_type = #tpu.core_type<tc>, window_params = [{transform_indices = @transform_0, window_bounds = array<i64: 8, 3>}, {pipeline_mode = #tpu.pipeline_mode<synchronous>, transform_indices = @transform_1, window_bounds = array<i64: 3, 64>}, {pipeline_mode = #tpu.pipeline_mode<synchronous>, transform_indices = @transform_2, window_bounds = array<i64: 1, 64>}, {pipeline_mode = #tpu.pipeline_mode<synchronous>, transform_indices = @transform_3, window_bounds = array<i64: 64, 128>}, {pipeline_mode = #tpu.pipeline_mode<synchronous>, transform_indices = @transform_4, window_bounds = array<i64: 1, 128>}, {pipeline_mode = #tpu.pipeline_mode<synchronous>, transform_indices = @transform_5, window_bounds = array<i64: 1, 128>}, {transform_indices = @transform_6, window_bounds = array<i64: 1>}, {transform_indices = @transform_7, window_bounds = array<i64: 1, 1, 8>}]} {
    %c0 = arith.constant 0 : index
    %c0_0 = arith.constant 0 : index
    %0 = vector.load %arg2[%c0, %c0_0] : memref<3x64xf32, #tpu.memory_space<vmem>>, vector<3x64xf32>
    %c0_1 = arith.constant 0 : index
    %c0_2 = arith.constant 0 : index
    %1 = vector.load %arg3[%c0_1, %c0_2] : memref<1x64xf32, #tpu.memory_space<vmem>>, vector<1x64xf32>
    %c0_3 = arith.constant 0 : index
    %c0_4 = arith.constant 0 : index
    %2 = vector.load %arg4[%c0_3, %c0_4] : memref<64x128xf32, #tpu.memory_space<vmem>>, vector<64x128xf32>
    %c0_5 = arith.constant 0 : index
    %c0_6 = arith.constant 0 : index
    %3 = vector.load %arg5[%c0_5, %c0_6] : memref<1x128xf32, #tpu.memory_space<vmem>>, vector<1x128xf32>
    %c0_7 = arith.constant 0 : index
    %c0_8 = arith.constant 0 : index
    %4 = vector.load %arg6[%c0_7, %c0_8] : memref<1x128xf32, #tpu.memory_space<vmem>>, vector<1x128xf32>
    %c0_9 = arith.constant 0 : index
    %5 = memref.load %arg7[%c0_9] : memref<1xf32, #tpu.memory_space<smem>>
    %c0_10 = arith.constant 0 : index
    %c0_11 = arith.constant 0 : index
    %6 = vector.load %arg1[%c0_10, %c0_11] : memref<8x3xf32, #tpu.memory_space<vmem>>, vector<8x3xf32>
    %7 = vector.extract_strided_slice %6 {offsets = [0, 0], sizes = [8, 1], strides = [1, 1]} : vector<8x3xf32> to vector<8x1xf32>
    %8 = vector.extract_strided_slice %0 {offsets = [0, 0], sizes = [1, 64], strides = [1, 1]} : vector<3x64xf32> to vector<1x64xf32>
    %9 = vector.broadcast %7 : vector<8x1xf32> to vector<8x64xf32>
    %10 = vector.broadcast %8 : vector<1x64xf32> to vector<8x64xf32>
    %11 = arith.mulf %9, %10 : vector<8x64xf32>
    %12 = vector.broadcast %1 : vector<1x64xf32> to vector<8x64xf32>
    %13 = arith.addf %12, %11 : vector<8x64xf32>
    %14 = vector.extract_strided_slice %6 {offsets = [0, 1], sizes = [8, 1], strides = [1, 1]} : vector<8x3xf32> to vector<8x1xf32>
    %15 = vector.extract_strided_slice %0 {offsets = [1, 0], sizes = [1, 64], strides = [1, 1]} : vector<3x64xf32> to vector<1x64xf32>
    %16 = vector.broadcast %14 : vector<8x1xf32> to vector<8x64xf32>
    %17 = vector.broadcast %15 : vector<1x64xf32> to vector<8x64xf32>
    %18 = arith.mulf %16, %17 : vector<8x64xf32>
    %19 = arith.addf %13, %18 : vector<8x64xf32>
    %20 = vector.extract_strided_slice %6 {offsets = [0, 2], sizes = [8, 1], strides = [1, 1]} : vector<8x3xf32> to vector<8x1xf32>
    %21 = vector.extract_strided_slice %0 {offsets = [2, 0], sizes = [1, 64], strides = [1, 1]} : vector<3x64xf32> to vector<1x64xf32>
    %22 = vector.broadcast %20 : vector<8x1xf32> to vector<8x64xf32>
    %23 = vector.broadcast %21 : vector<1x64xf32> to vector<8x64xf32>
    %24 = arith.mulf %22, %23 : vector<8x64xf32>
    %25 = arith.addf %19, %24 : vector<8x64xf32>
    %cst = arith.constant 0.000000e+00 : f32
    %26 = vector.broadcast %cst : f32 to vector<8x64xf32>
    %27 = arith.maximumf %25, %26 : vector<8x64xf32>
    %cst_12 = arith.constant dense<0.000000e+00> : vector<8x128xf32>
    %28 = tpu.matmul %27, %2, %cst_12 {dimension_numbers = #tpu.dot_dimension_numbers<[1], [0], [0], [1], [0, 0, 1, 1], [], []>} : vector<8x64xf32>, vector<64x128xf32>, vector<8x128xf32> -> vector<8x128xf32>
    %29 = vector.broadcast %3 : vector<1x128xf32> to vector<8x128xf32>
    %30 = arith.addf %28, %29 : vector<8x128xf32>
    %cst_13 = arith.constant 0.000000e+00 : f32
    %31 = vector.broadcast %cst_13 : f32 to vector<8x128xf32>
    %32 = arith.maximumf %30, %31 : vector<8x128xf32>
    %33 = vector.broadcast %4 : vector<1x128xf32> to vector<8x128xf32>
    %34 = arith.mulf %32, %33 : vector<8x128xf32>
    %cst_14 = arith.constant dense<0.000000e+00> : vector<8xf32>
    %35 = vector.multi_reduction <add>, %34, %cst_14 [1] : vector<8x128xf32> to vector<8xf32>
    %36 = vector.broadcast %5 : f32 to vector<8xf32>
    %37 = arith.addf %35, %36 : vector<8xf32>
    %38 = vector.shape_cast %37 : vector<8xf32> to vector<1x8xf32>
    %c0_15 = arith.constant 0 : index
    %c0_16 = arith.constant 0 : index
    %c0_17 = arith.constant 0 : index
    %39 = vector.load %arg8[%c0_15, %c0_16, %c0_17] : memref<1x1x8xf32, #tpu.memory_space<vmem>>, vector<1x1x8xf32>
    %40 = vector.shape_cast %39 : vector<1x1x8xf32> to vector<1x8xf32>
    %41 = vector.shape_cast %38 : vector<1x8xf32> to vector<1x1x8xf32>
    tpu.vector_store %arg8[%c0_15, %c0_16, %c0_17], %41 {strides = array<i32>} : memref<1x1x8xf32, #tpu.memory_space<vmem>>, vector<1x1x8xf32>,
    return
  }
  func.func @transform_0(%arg0: i32) -> (i32, i32) {
    %c0_i32 = arith.constant 0 : i32
    %c0_i32_0 = arith.constant 0 : i32
    return %arg0, %c0_i32 : i32, i32
  }
  func.func @transform_1(%arg0: i32) -> (i32, i32) {
    %c0_i32 = arith.constant 0 : i32
    %c0_i32_0 = arith.constant 0 : i32
    %c0_i32_1 = arith.constant 0 : i32
    return %c0_i32, %c0_i32_0 : i32, i32
  }
  func.func @transform_2(%arg0: i32) -> (i32, i32) {
    %c0_i32 = arith.constant 0 : i32
    %c0_i32_0 = arith.constant 0 : i32
    %c0_i32_1 = arith.constant 0 : i32
    return %c0_i32, %c0_i32_0 : i32, i32
  }
  func.func @transform_3(%arg0: i32) -> (i32, i32) {
    %c0_i32 = arith.constant 0 : i32
    %c0_i32_0 = arith.constant 0 : i32
    %c0_i32_1 = arith.constant 0 : i32
    return %c0_i32, %c0_i32_0 : i32, i32
  }
  func.func @transform_4(%arg0: i32) -> (i32, i32) {
    %c0_i32 = arith.constant 0 : i32
    %c0_i32_0 = arith.constant 0 : i32
    %c0_i32_1 = arith.constant 0 : i32
    return %c0_i32, %c0_i32_0 : i32, i32
  }
  func.func @transform_5(%arg0: i32) -> (i32, i32) {
    %c0_i32 = arith.constant 0 : i32
    %c0_i32_0 = arith.constant 0 : i32
    %c0_i32_1 = arith.constant 0 : i32
    return %c0_i32, %c0_i32_0 : i32, i32
  }
  func.func @transform_6(%arg0: i32) -> i32 {
    %c0_i32 = arith.constant 0 : i32
    %c0_i32_0 = arith.constant 0 : i32
    return %c0_i32 : i32
  }
  func.func @transform_7(%arg0: i32) -> (i32, i32, i32) {
    %c0_i32 = arith.constant 0 : i32
    %c0_i32_0 = arith.constant 0 : i32
    %c0_i32_1 = arith.constant 0 : i32
    return %arg0, %c0_i32, %c0_i32_0 : i32, i32, i32
  }
}

</mosaic_0001>

<llo_original>
// kernel: _forward_padded.1
$region0: #{_forward_padded.1}
  #allocation0 [shape = 'u32[]', space=smem, size = 0x4, offset = 0x4, fixed_abs, tag = 'smem constant byte address 0x4 - core index']
  #allocation1 [shape = 'u32[144,128]{1,0:T(1,128)}', space=vmem, size = 0x12000, scoped, tag = 'internal scratch']
  #allocation2 [shape = 'f32[1]{0:T(128)S(6)}', space=smem, size = 0x200, scoped, tag = 'scoped memory for _forward_padded.1']
  %s0 = inlined_call_operand.vmem [shape: f32[8,3], index: 0, kind: input, shape index: {}]
  %s1 = inlined_call_operand.vmem [shape: f32[3,64], index: 1, kind: input, shape index: {}]
  %s2 = inlined_call_operand.vmem [shape: f32[1,64], index: 2, kind: input, shape index: {}]
  %s3 = inlined_call_operand.hbm [shape: f32[64,128], index: 3, kind: input, shape index: {}]
  %s4 = inlined_call_operand.vmem [shape: f32[1,128], index: 4, kind: input, shape index: {}]
  %s5 = inlined_call_operand.vmem [shape: f32[1,128], index: 5, kind: input, shape index: {}]
  %s6 = inlined_call_operand.<no memory space> [shape: f32[1], index: 6, kind: input, shape index: {}]
  %s7 = inlined_call_operand.hbm [shape: f32[1,1,8], index: 7, kind: output, shape index: {}]
  %s8 = sld [smem:[#allocation0]]
  $region42: #{_forward_padded.1} parent=0
    _
  %s10 = ssub.s32 1, %s8
  %s11 = scalar_select 0, %s10, %s8
  %12 = sst [smem:[#allocation2]] %s6
  $region1: #{_forward_padded.1} parent=0
    #allocation3 [shape = 'u8[32768]{0}', space=vmem, size = 0x8000, scoped, tag = 'input window, operand 3, single buffered']
    #allocation4 [shape = 's32[1]{0}', space=sflag, size = 0x4, scoped, tag = 'scoped memory for _forward_padded.1']
    #allocation5 [shape = 's32[1]{0}', space=sflag, size = 0x4, scoped, tag = 'scoped memory for _forward_padded.1']
    #allocation6 [shape = 'u8[512]{0}', space=vmem, size = 0x400, scoped, tag = 'output window, operand 0, single buffered']
    %13 = vsyncpa [#allocation4], 0
    %14 = vsyncpa [#allocation5], 0
    // Predicated region
    $region2: #{_forward_padded.1} parent=1 // pred_check
      _
    $region3: #{_forward_padded.1} parent=1 // pred_check_branch
      %16 = sbr.rel (0) target = $region5
    $region4: #{_forward_padded.1} parent=1 // pred_region
      _
    $region5: #{_forward_padded.1} parent=1 // pred_fallthru
      _
    // Predicated region
    $region6: #{_forward_padded.1} parent=1 // pred_check
      _
    $region7: #{_forward_padded.1} parent=1 // pred_check_branch
      %18 = sbr.rel (0) target = $region9
    $region8: #{_forward_padded.1} parent=1 // pred_region
      _
    $region9: #{_forward_padded.1} parent=1 // pred_fallthru
      _
    // Predicated region
    $region10: #{_forward_padded.1} parent=1 // pred_check
      _
    $region11: #{_forward_padded.1} parent=1 // pred_check_branch
      %20 = sbr.rel (0) target = $region13
    $region12: #{_forward_padded.1} parent=1 // pred_region
      _
    $region13: #{_forward_padded.1} parent=1 // pred_fallthru
      _
    // Predicated region
    $region14: #{_forward_padded.1} parent=1 // pred_check
      _
    $region15: #{_forward_padded.1} parent=1 // pred_check_branch
      %22 = sbr.rel (0) target = $region17
    $region16: #{_forward_padded.1} parent=1 // pred_region
      %s24 = ssub.s32 1024, 1024
      %25 = vsyncadd [#allocation4], %s24
      %s26 = sshll.u32 [#allocation3], 4
      %s27 = int_to_ptr.vmem [resolvable:$true] %s26
      %32 = dma.hbm_to_vmem [thread:$0]  %s3, 1024, %s27, [#allocation4], 128, 128, 8
    $region17: #{_forward_padded.1} parent=1 // pred_fallthru
      _
    // Predicated region
    $region18: #{_forward_padded.1} parent=1 // pred_check
      _
    $region19: #{_forward_padded.1} parent=1 // pred_check_branch
      %34 = sbr.rel (0) target = $region21
    $region20: #{_forward_padded.1} parent=1 // pred_region
      _
    $region21: #{_forward_padded.1} parent=1 // pred_fallthru
      _
    // Predicated region
    $region22: #{_forward_padded.1} parent=1 // pred_check
      _
    $region23: #{_forward_padded.1} parent=1 // pred_check_branch
      %36 = sbr.rel (0) target = $region25
    $region24: #{_forward_padded.1} parent=1 // pred_region
      _
    $region25: #{_forward_padded.1} parent=1 // pred_fallthru
      _
    // Predicated region
    $region26: #{_forward_padded.1} parent=1 // pred_check
      _
    $region27: #{_forward_padded.1} parent=1 // pred_check_branch
      %38 = sbr.rel (0) target = $region29
    $region28: #{_forward_padded.1} parent=1 // pred_region
      _
    $region29: #{_forward_padded.1} parent=1 // pred_fallthru
      _
    // Predicated region
    $region30: #{_forward_padded.1} parent=1 // pred_check
      _
    $region31: #{_forward_padded.1} parent=1 // pred_check_branch
      %40 = sbr.rel (0) target = $region33
    $region32: #{_forward_padded.1} parent=1 // pred_region
      %41 = dma.done [#allocation4], 1024
    $region33: #{_forward_padded.1} parent=1 // pred_fallthru
      _
    %v42 = vld [vmem:[%s1] sm:$0x7]
    %v43 = vld [vmem:[%s2] sm:$0x1]
    %v44 = vld [vmem:[#allocation3] sm:$0xff]
    %v45 = vld [vmem:[#allocation3 + $0x8] sm:$0xff]
    %v46 = vld [vmem:[#allocation3 + $0x10] sm:$0xff]
    %v47 = vld [vmem:[#allocation3 + $0x18] sm:$0xff]
    %v48 = vld [vmem:[#allocation3 + $0x20] sm:$0xff]
    %v49 = vld [vmem:[#allocation3 + $0x28] sm:$0xff]
    %v50 = vld [vmem:[#allocation3 + $0x30] sm:$0xff]
    %v51 = vld [vmem:[#allocation3 + $0x38] sm:$0xff]
    %v52 = vld [vmem:[%s4] sm:$0x1]
    %v53 = vld [vmem:[%s5] sm:$0x1]
    %s54 = sld [smem:[#allocation2]]
    %v55 = vld [vmem:[%s0] sm:$0xff]
    %57 = vset.pattern.permute.xlu0 0
    %58 = vperm.xlu0 %57, %v55
    %v59 = vpop.permute.xlu0 %58
    %v61 = vlaneseq
    %v62 = vshrl.u32 %v61, 7
    %v63 = vsub.s32 0, %v62
    %v64 = vrot.slane %v42, %v63
    %v65 = vmul.f32 %v59, %v64
    %v67 = vlaneseq
    %v68 = vshrl.u32 %v67, 7
    %v69 = vsub.s32 0, %v68
    %v70 = vrot.slane %v43, %v69
    %v72 = vadd.f32 %v70, %v65
    %73 = vset.pattern.permute.xlu0 1
    %74 = vperm.xlu0 %73, %v55
    %v75 = vpop.permute.xlu0 %74
    %v77 = vlaneseq
    %v78 = vshrl.u32 %v77, 7
    %v79 = vsub.s32 1, %v78
    %v80 = vrot.slane %v42, %v79
    %v81 = vmul.f32 %v75, %v80
    %v82 = vadd.f32 %v72, %v81
    %83 = vset.pattern.permute.xlu0 2
    %84 = vperm.xlu0 %83, %v55
    %v85 = vpop.permute.xlu0 %84
    %v87 = vlaneseq
    %v88 = vshrl.u32 %v87, 7
    %v89 = vsub.s32 2, %v88
    %v90 = vrot.slane %v42, %v89
    %v91 = vmul.f32 %v85, %v90
    %v92 = vadd.f32 %v82, %v91
    %v93 = vmax.f32 %v92, 0.0
    %v95 = vlaneseq
    %v96 = vshrl.u32 %v95, 7
    %v97 = vsub.s32 0, %v96
    %v98 = vrot.slane %v52, %v97
    %vm100 = vcmask 523264
    %v102 = vsel %vm100, %v93, 0
    %104 = vmatprep.subr.mxu0 0.0
    %105 = vmatpush1.msra.mxu0 %v44
    %106 = vmatprep.subr.mxu0 0.0
    %107 = vmatpush1.msra.mxu0 %v45
    %108 = vmatprep.subr.mxu0 0.0
    %109 = vmatpush1.msra.mxu0 %v46
    %110 = vmatprep.subr.mxu0 0.0
    %111 = vmatpush1.msra.mxu0 %v47
    %112 = vmatprep.subr.mxu0 0.0
    %113 = vmatpush1.msra.mxu0 %v48
    %114 = vmatprep.subr.mxu0 0.0
    %115 = vmatpush1.msra.mxu0 %v49
    %116 = vmatprep.subr.mxu0 0.0
    %117 = vmatpush1.msra.mxu0 %v50
    %118 = vmatprep.subr.mxu0 0.0
    %119 = vmatpush1.msra.mxu0 %v51
    %120 = vmatprep.subr.mxu0 0.0
    %121 = vmatpush1.msra.mxu0 0.0
    %122 = vmatprep.subr.mxu0 0.0
    %123 = vmatpush1.msra.mxu0 0.0
    %124 = vmatprep.subr.mxu0 0.0
    %125 = vmatpush1.msra.mxu0 0.0
    %126 = vmatprep.subr.mxu0 0.0
    %127 = vmatpush1.msra.mxu0 0.0
    %128 = vmatprep.subr.mxu0 0.0
    %129 = vmatpush1.msra.mxu0 0.0
    %130 = vmatprep.subr.mxu0 0.0
    %131 = vmatpush1.msra.mxu0 0.0
    %132 = vmatprep.subr.mxu0 0.0
    %133 = vmatpush1.msra.mxu0 0.0
    %134 = vmatprep.subr.mxu0 0.0
    %135 = vmatpush1.msra.mxu0 0.0
    %136 = vmatprep.subr.mxu0 0.0
    %137 = vmatpush1.msra.mxu0 0.0
    %138 = vmatprep.subr.mxu0 0.0
    %139 = vmatpush1.msra.mxu0 0.0
    %140 = vmatprep.subr.mxu0 0.0
    %141 = vmatpush1.msra.mxu0 0.0
    %142 = vmatprep.subr.mxu0 0.0
    %143 = vmatpush1.msra.mxu0 0.0
    %144 = vmatprep.subr.mxu0 0.0
    %145 = vmatpush1.msra.mxu0 0.0
    %146 = vmatprep.subr.mxu0 0.0
    %147 = vmatpush1.msra.mxu0 0.0
    %148 = vmatprep.subr.mxu0 0.0
    %149 = vmatpush1.msra.mxu0 0.0
    %150 = vmatprep.subr.mxu0 0.0
    %151 = vmatpush1.msra.mxu0 0.0
    %152 = vmatprep.subr.mxu0 0.0
    %153 = vmatpush1.msra.mxu0 0.0
    %154 = vmatprep.subr.mxu0 0.0
    %155 = vmatpush1.msra.mxu0 0.0
    %156 = vmatprep.subr.mxu0 0.0
    %157 = vmatpush1.msra.mxu0 0.0
    %158 = vmatprep.subr.mxu0 0.0
    %159 = vmatpush1.msra.mxu0 0.0
    %160 = vmatprep.subr.mxu0 0.0
    %161 = vmatpush1.msra.mxu0 0.0
    %162 = vmatprep.subr.mxu0 0.0
    %163 = vmatpush1.msra.mxu0 0.0
    %164 = vmatprep.subr.mxu0 0.0
    %165 = vmatpush1.msra.mxu0 0.0
    %166 = vmatprep.subr.mxu0 0.0
    %167 = vmatpush1.msra.mxu0 0.0
    %168 = vmatprep.mubr.f32.mxu0 0.0
    %169 = vmatmul.mubr.f32.gmra.mrb[0].mxu0 %v102
    %v170 = vpop.f32.mrb[0].mxu0
    %v171 = vadd.f32 %v98, %v170
    %v172 = vpop.f32.mrb[0].mxu0
    %173 = vdwg.mxu0
    %v174 = vmax.f32 %v171, 0.0
    %v176 = vlaneseq
    %v177 = vshrl.u32 %v176, 7
    %v178 = vsub.s32 0, %v177
    %v179 = vrot.slane %v53, %v178
    %v181 = vmul.f32 %v174, %v179
    %182 = vadd.xlane.f32.xlu0 %v181
    %v183 = vpop.xlane.xlu0 %182
    %v184 = vstv %s54
    %v185 = vadd.f32 %v183, %v184
    %v187 = vlaneseq
    %v188 = vand.u32 %v187, 127
    %v189 = vlaneseq
    %v190 = vshrl.u32 %v189, 7
    %v191 = vsub.s32 %v188, %v190
    %v192 = vrot.slane %v185, %v191
    %vm194 = vcmask 57344
    %195 = vst.msk [vmem:[#allocation6] sm:$0x1] %vm194, %v192
    // Predicated region
    $region34: #{_forward_padded.1} parent=1 // pred_check
      _
    $region35: #{_forward_padded.1} parent=1 // pred_check_branch
      %197 = sbr.rel (0) target = $region37
    $region36: #{_forward_padded.1} parent=1 // pred_region
      %s199 = ssub.s32 16, 16
      %200 = vsyncadd [#allocation5], %s199
      %s202 = sshll.u32 [#allocation6], 4
      %s203 = int_to_ptr.vmem [resolvable:$true] %s202
      %205 = dma.vmem_to_hbm [thread:$0]  %s203, 16, %s7, [#allocation5]
    $region37: #{_forward_padded.1} parent=1 // pred_fallthru
      _
    // Predicated region
    $region38: #{_forward_padded.1} parent=1 // pred_check
      _
    $region39: #{_forward_padded.1} parent=1 // pred_check_branch
      %207 = sbr.rel (0) target = $region41
    $region40: #{_forward_padded.1} parent=1 // pred_region
      %208 = dma.done [#allocation5], 16
    $region41: #{_forward_padded.1} parent=1 // pred_fallthru
      _
    %209 = vsyncpa [#allocation4], 1
    %210 = vsyncpa [#allocation5], 1

</llo_original>
